<compile_context>
chip_gen: v6e
topology: v6e:2x2x1
jax: 0.10.0
libtpu: 0.0.40
codegen_flags: <defaults>
</compile_context>

<pallas_src>
import jax
import jax.numpy as jnp
from jax.experimental import pallas as pl
from jax.experimental.pallas import tpu as pltpu


def _identity_noop_kernel(x_hbm_ref, o_hbm_ref):
    # ResNetBlock.forward == identity.  The output buffer aliases the input
    # buffer, so it already contains the correct data: issue zero DMAs and
    # zero vector ops.  (Refs intentionally untouched.)
    del x_hbm_ref, o_hbm_ref


@jax.jit
def resnet_block_forward(x: jax.Array) -> jax.Array:
    """Pallas ResNetBlock.forward (identity): zero in-kernel data movement."""
    return pl.pallas_call(
        _identity_noop_kernel,
        out_shape=jax.ShapeDtypeStruct(x.shape, x.dtype),
        in_specs=[pl.BlockSpec(memory_space=pl.ANY)],   # raw HBM ref, no auto-DMA
        out_specs=pl.BlockSpec(memory_space=pl.ANY),    # raw HBM ref, no auto-DMA
        input_output_aliases={0: 0},                    # output IS the input buffer
        cost_estimate=pl.CostEstimate(
            flops=0, transcendentals=0, bytes_accessed=0),
    )(x)


def _identity_dma_copy_kernel(x_hbm_ref, o_hbm_ref, copy_sem):
    # Aliasing dropped: materialize a distinct output with ONE HBM->HBM DMA.
    # No VMEM staging (no in-DMA / vld / vst / out-DMA chain), no grid, no
    # per-step overhead -- HBM read+write bandwidth is the only cost, which is
    # the floor for producing a distinct output buffer.
    cp = pltpu.make_async_copy(x_hbm_ref, o_hbm_ref, copy_sem)
    cp.start()
    cp.wait()


@jax.jit
def resnet_block_forward_copy(x: jax.Array) -> jax.Array:
    """Identity forward that returns a distinct output buffer (no aliasing)."""
    nbytes = x.size * jnp.dtype(x.dtype).itemsize
    return pl.pallas_call(
        _identity_dma_copy_kernel,
        out_shape=jax.ShapeDtypeStruct(x.shape, x.dtype),
        in_specs=[pl.BlockSpec(memory_space=pl.ANY)],
        out_specs=pl.BlockSpec(memory_space=pl.ANY),
        scratch_shapes=[pltpu.SemaphoreType.DMA],
        cost_estimate=pl.CostEstimate(
            flops=0, transcendentals=0, bytes_accessed=2 * nbytes),
    )(x)


if __name__ == "__main__":
    # ResNetBlock has no parameters (empty __init__); nothing to initialize.
    key = jax.random.PRNGKey(0)
    x = jax.random.normal(key, (2, 4, 16, 16), dtype=jnp.float32)  # NCHW

    # Primary path: aliased no-op kernel (zero data movement inside the kernel).
    y = jax.block_until_ready(resnet_block_forward(x))
    assert y.shape == x.shape and y.dtype == x.dtype
    assert bool(jnp.array_equal(y, x))

    # Alternate path: distinct output buffer via a single HBM->HBM DMA.
    y2 = jax.block_until_ready(resnet_block_forward_copy(x))
    assert y2.shape == x.shape and y2.dtype == x.dtype
    assert bool(jnp.array_equal(y2, x))

    print("KERNEL_OK")
</pallas_src>

<mosaic_0001>
module attributes {stable_mosaic.version = 11 : i64} {
  func.func @_identity_noop_kernel(%arg0: memref<2x4x16x16xf32, #tpu.memory_space<any>>, %arg1: memref<2x4x16x16xf32, #tpu.memory_space<any>>) attributes {dimension_semantics = [], scalar_prefetch = 0 : i64, scratch_operands = 0 : i64, tpu.core_type = #tpu.core_type<tc>} {
    return
  }
}

</mosaic_0001>

<llo_original>
// kernel: resnet_block_forward.1
$region0: #{resnet_block_forward.1}
  #allocation0 [shape = 'u32[]', space=smem, size = 0x4, offset = 0x4, fixed_abs, tag = 'smem constant byte address 0x4 - core index']
  #allocation1 [shape = 'u32[144,128]{1,0:T(1,128)}', space=vmem, size = 0x12000, scoped, tag = 'internal scratch']
  %s0 = inlined_call_operand.hbm [shape: f32[2,4,16,16], index: 0, kind: input, shape index: {}, may-alias: {0,1}]
  %s1 = inlined_call_operand.hbm [shape: f32[2,4,16,16], index: 1, kind: output, shape index: {}, may-alias: {0,1}]
  %s2 = sld [smem:[#allocation0]]
  $region2: #{resnet_block_forward.1} parent=0
    _
  %s4 = ssub.s32 1, %s2
  %s5 = scalar_select 0, %s4, %s2

</llo_original>
